<compile_context>
chip_gen: v7x
topology: tpu7x:2x2x1
jax: 0.10.0
libtpu: 0.0.40
codegen_flags: <defaults>
</compile_context>

<pallas_src>
import functools

import jax
import jax.numpy as jnp
from jax.experimental import pallas as pl
from jax.experimental.pallas import tpu as pltpu


def _round_up(x, m):
    return ((x + m - 1) // m) * m


def _degree_encoder_both_kernel(in_deg_ref, out_deg_ref, emb_ref, out_ref, *,
                                max_degree, v_offset):
    """Fused both-direction lookup: one (TILE_N, 2*Vp) @ (2*Vp, Dp) MXU matmul."""
    tile_n = in_deg_ref.shape[0]
    k = emb_ref.shape[0]  # 2 * v_offset (both zero-padded tables stacked)

    in_deg = jnp.clip(in_deg_ref[...], 0, max_degree)                # (TILE_N, 1)
    out_deg = jnp.clip(out_deg_ref[...], 0, max_degree) + v_offset   # 2nd table half

    iota = jax.lax.broadcasted_iota(jnp.int32, (tile_n, k), 1)
    onehot = ((iota == in_deg) | (iota == out_deg)).astype(emb_ref.dtype)

    out_ref[...] = jnp.dot(onehot, emb_ref[...],
                           preferred_element_type=jnp.float32).astype(out_ref.dtype)


def _degree_encoder_single_kernel(deg_ref, emb_ref, out_ref, *, max_degree):
    tile_n = deg_ref.shape[0]
    k = emb_ref.shape[0]
    deg = jnp.clip(deg_ref[...], 0, max_degree)                      # (TILE_N, 1)
    iota = jax.lax.broadcasted_iota(jnp.int32, (tile_n, k), 1)
    onehot = (iota == deg).astype(emb_ref.dtype)
    out_ref[...] = jnp.dot(onehot, emb_ref[...],
                           preferred_element_type=jnp.float32).astype(out_ref.dtype)


def degree_encoder_forward(in_degrees, out_degrees, params, direction="both",
                           tile_n=512):
    """Pallas DegreeEncoder forward.

    in_degrees, out_degrees : int arrays of shape (N,)
    params : dict of embedding tables (V, D) = (max_degree + 1, embedding_dim)
    returns: (N, D) float32 degree embeddings
    """
    N = int(in_degrees.shape[0])

    # Row tile over nodes: multiple of 8 (sublanes), capped at `tile_n`.
    tn = max(8, min(int(tile_n), _round_up(N, 8)))
    n_pad = _round_up(N, tn)
    grid = (n_pad // tn,)

    def prep_deg(d):
        d = d.astype(jnp.int32).reshape(-1, 1)
        if n_pad > N:
            d = jnp.pad(d, ((0, n_pad - N), (0, 0)))  # padded rows -> degree 0
        return d

    deg_spec = pl.BlockSpec((tn, 1), lambda i: (i, 0))
    compiler_params = pltpu.CompilerParams(dimension_semantics=("parallel",))

    if direction == "both":
        emb1, emb2 = params["emb1"], params["emb2"]
        V, D = emb1.shape
        max_degree = V - 1
        v_pad = _round_up(V, 128)
        d_pad = _round_up(D, 128)

        # Stack the two (zero-padded) tables vertically -> one fused lookup table.
        table = jnp.zeros((2 * v_pad, d_pad), emb1.dtype)
        table = table.at[:V, :D].set(emb1)
        table = table.at[v_pad:v_pad + V, :D].set(emb2)

        kernel = functools.partial(_degree_encoder_both_kernel,
                                   max_degree=max_degree, v_offset=v_pad)
        flops = 2 * n_pad * (2 * v_pad) * d_pad
        bytes_accessed = (2 * n_pad * 4
                          + 2 * v_pad * d_pad * table.dtype.itemsize
                          + n_pad * d_pad * 4)

        out = pl.pallas_call(
            kernel,
            out_shape=jax.ShapeDtypeStruct((n_pad, d_pad), jnp.float32),
            grid=grid,
            in_specs=[deg_spec, deg_spec,
                      pl.BlockSpec((2 * v_pad, d_pad), lambda i: (0, 0))],
            out_specs=pl.BlockSpec((tn, d_pad), lambda i: (i, 0)),
            compiler_params=compiler_params,
            cost_estimate=pl.CostEstimate(flops=flops, transcendentals=0,
                                          bytes_accessed=bytes_accessed),
        )(prep_deg(in_degrees), prep_deg(out_degrees), table)
        return out[:N, :D]

    if direction in ("in", "out"):
        emb = params["emb"]
        V, D = emb.shape
        max_degree = V - 1
        v_pad = _round_up(V, 128)
        d_pad = _round_up(D, 128)

        table = jnp.zeros((v_pad, d_pad), emb.dtype).at[:V, :D].set(emb)
        deg = in_degrees if direction == "in" else out_degrees

        kernel = functools.partial(_degree_encoder_single_kernel,
                                   max_degree=max_degree)
        flops = 2 * n_pad * v_pad * d_pad
        bytes_accessed = (n_pad * 4
                          + v_pad * d_pad * table.dtype.itemsize
                          + n_pad * d_pad * 4)

        out = pl.pallas_call(
            kernel,
            out_shape=jax.ShapeDtypeStruct((n_pad, d_pad), jnp.float32),
            grid=grid,
            in_specs=[deg_spec,
                      pl.BlockSpec((v_pad, d_pad), lambda i: (0, 0))],
            out_specs=pl.BlockSpec((tn, d_pad), lambda i: (i, 0)),
            compiler_params=compiler_params,
            cost_estimate=pl.CostEstimate(flops=flops, transcendentals=0,
                                          bytes_accessed=bytes_accessed),
        )(prep_deg(deg), table)
        return out[:N, :D]

    raise ValueError(
        f'Supported direction options: "in", "out" and "both", but got {direction}')


def init_params(key, max_degree, embedding_dim, direction="both"):
    """Deterministic init mirroring nn.Embedding: N(0,1) weights, padding_idx=0 row zeroed."""
    V = max_degree + 1

    def make_table(k):
        w = jax.random.normal(k, (V, embedding_dim), dtype=jnp.float32)
        return w.at[0].set(0.0)  # padding_idx = 0

    if direction == "both":
        k1, k2 = jax.random.split(key)
        return {"emb1": make_table(k1), "emb2": make_table(k2)}
    return {"emb": make_table(key)}


if __name__ == "__main__":
    # Example graph (as in the DGL docstring): edges
    #   (0,0,0,1,1,2,3,3) -> (1,2,3,0,3,0,0,1); use 8 nodes (extras have degree 0).
    max_degree = 5
    embedding_dim = 32
    N = 8

    src = jnp.array([0, 0, 0, 1, 1, 2, 3, 3], dtype=jnp.int32)
    dst = jnp.array([1, 2, 3, 0, 3, 0, 0, 1], dtype=jnp.int32)
    in_degrees = jnp.zeros((N,), jnp.int32).at[dst].add(1)    # in-degree per node
    out_degrees = jnp.zeros((N,), jnp.int32).at[src].add(1)   # out-degree per node

    key = jax.random.PRNGKey(0)
    params_both = init_params(key, max_degree, embedding_dim, direction="both")
    params_in = init_params(key, max_degree, embedding_dim, direction="in")

    out_both = degree_encoder_forward(in_degrees, out_degrees, params_both,
                                      direction="both")
    out_in = degree_encoder_forward(in_degrees, out_degrees, params_in,
                                    direction="in")
    out_both, out_in = jax.block_until_ready((out_both, out_in))

    # Reference check in plain JAX (gather semantics).
    in_c = jnp.clip(in_degrees, 0, max_degree)
    out_c = jnp.clip(out_degrees, 0, max_degree)
    ref_both = params_both["emb1"][in_c] + params_both["emb2"][out_c]
    ref_in = params_in["emb"][in_c]

    assert out_both.shape == (N, embedding_dim)
    assert out_in.shape == (N, embedding_dim)
    assert jnp.allclose(out_both, ref_both, atol=1e-5), "mismatch vs reference (both)"
    assert jnp.allclose(out_in, ref_in, atol=1e-5), "mismatch vs reference (in)"

    print("KERNEL_OK")
</pallas_src>

<mosaic_0001>
module attributes {stable_mosaic.version = 11 : i64} {
  func.func @_degree_encoder_both_kernel(%arg0: i32, %arg1: memref<8x1xi32, #tpu.memory_space<vmem>>, %arg2: memref<8x1xi32, #tpu.memory_space<vmem>>, %arg3: memref<256x128xf32, #tpu.memory_space<vmem>>, %arg4: memref<8x128xf32, #tpu.memory_space<vmem>>) attributes {dimension_semantics = [#tpu.dimension_semantics<parallel>], iteration_bounds = array<i64: 1>, scalar_prefetch = 0 : i64, scratch_operands = 0 : i64, tpu.core_type = #tpu.core_type<tc>, window_params = [{transform_indices = @transform_0, window_bounds = array<i64: 8, 1>}, {transform_indices = @transform_1, window_bounds = array<i64: 8, 1>}, {pipeline_mode = #tpu.pipeline_mode<synchronous>, transform_indices = @transform_2, window_bounds = array<i64: 256, 128>}, {transform_indices = @transform_3, window_bounds = array<i64: 8, 128>}]} {
    %c0 = arith.constant 0 : index
    %c0_0 = arith.constant 0 : index
    %0 = vector.load %arg1[%c0, %c0_0] : memref<8x1xi32, #tpu.memory_space<vmem>>, vector<8x1xi32>
    %c0_i32 = arith.constant 0 : i32
    %c5_i32 = arith.constant 5 : i32
    %1 = vector.broadcast %c0_i32 : i32 to vector<8x1xi32>
    %2 = arith.maxsi %1, %0 : vector<8x1xi32>
    %3 = vector.broadcast %c5_i32 : i32 to vector<8x1xi32>
    %4 = arith.minsi %3, %2 : vector<8x1xi32>
    %c0_1 = arith.constant 0 : index
    %c0_2 = arith.constant 0 : index
    %5 = vector.load %arg2[%c0_1, %c0_2] : memref<8x1xi32, #tpu.memory_space<vmem>>, vector<8x1xi32>
    %c0_i32_3 = arith.constant 0 : i32
    %c5_i32_4 = arith.constant 5 : i32
    %6 = vector.broadcast %c0_i32_3 : i32 to vector<8x1xi32>
    %7 = arith.maxsi %6, %5 : vector<8x1xi32>
    %8 = vector.broadcast %c5_i32_4 : i32 to vector<8x1xi32>
    %9 = arith.minsi %8, %7 : vector<8x1xi32>
    %c128_i32 = arith.constant 128 : i32
    %10 = vector.broadcast %c128_i32 : i32 to vector<8x1xi32>
    %11 = arith.addi %9, %10 : vector<8x1xi32>
    %12 = tpu.iota {dimensions = array<i32: 1>} : vector<8x256xi32>
    %13 = vector.broadcast %4 : vector<8x1xi32> to vector<8x256xi32>
    %14 = arith.cmpi eq, %12, %13 : vector<8x256xi32>
    %15 = vector.broadcast %11 : vector<8x1xi32> to vector<8x256xi32>
    %16 = arith.cmpi eq, %12, %15 : vector<8x256xi32>
    %17 = arith.ori %14, %16 : vector<8x256xi1>
    %18 = arith.extui %17 : vector<8x256xi1> to vector<8x256xi32>
    %19 = arith.sitofp %18 : vector<8x256xi32> to vector<8x256xf32>
    %c0_5 = arith.constant 0 : index
    %c0_6 = arith.constant 0 : index
    %20 = vector.load %arg3[%c0_5, %c0_6] : memref<256x128xf32, #tpu.memory_space<vmem>>, vector<256x128xf32>
    %cst = arith.constant dense<0.000000e+00> : vector<8x128xf32>
    %21 = tpu.matmul %19, %20, %cst {dimension_numbers = #tpu.dot_dimension_numbers<[1], [0], [0], [1], [0, 0, 1, 1], [], []>} : vector<8x256xf32>, vector<256x128xf32>, vector<8x128xf32> -> vector<8x128xf32>
    %c0_7 = arith.constant 0 : index
    %c0_8 = arith.constant 0 : index
    %22 = vector.load %arg4[%c0_7, %c0_8] : memref<8x128xf32, #tpu.memory_space<vmem>>, vector<8x128xf32>
    tpu.vector_store %arg4[%c0_7, %c0_8], %21 {strides = array<i32>} : memref<8x128xf32, #tpu.memory_space<vmem>>, vector<8x128xf32>,
    return
  }
  func.func @transform_0(%arg0: i32) -> (i32, i32) {
    %c0_i32 = arith.constant 0 : i32
    %c0_i32_0 = arith.constant 0 : i32
    return %arg0, %c0_i32 : i32, i32
  }
  func.func @transform_1(%arg0: i32) -> (i32, i32) {
    %c0_i32 = arith.constant 0 : i32
    %c0_i32_0 = arith.constant 0 : i32
    return %arg0, %c0_i32 : i32, i32
  }
  func.func @transform_2(%arg0: i32) -> (i32, i32) {
    %c0_i32 = arith.constant 0 : i32
    %c0_i32_0 = arith.constant 0 : i32
    %c0_i32_1 = arith.constant 0 : i32
    return %c0_i32, %c0_i32_0 : i32, i32
  }
  func.func @transform_3(%arg0: i32) -> (i32, i32) {
    %c0_i32 = arith.constant 0 : i32
    %c0_i32_0 = arith.constant 0 : i32
    return %arg0, %c0_i32 : i32, i32
  }
}

</mosaic_0001>

<llo_original>
// kernel: tpu_custom_call.1
$region0: #{tpu_custom_call.1}
  #allocation0 [shape = 'u32[]', space=smem, size = 0x4, offset = 0x4, fixed_abs, tag = 'smem constant byte address 0x4 - core index']
  #allocation1 [shape = 'u32[144,128]{1,0:T(1,128)}', space=vmem, size = 0x12000, scoped, tag = 'internal scratch']
  %s0 = inlined_call_operand.vmem [shape: s32[8,1], index: 0, kind: input, shape index: {}]
  %s1 = inlined_call_operand.vmem [shape: s32[8,1], index: 1, kind: input, shape index: {}]
  %s2 = inlined_call_operand.hbm [shape: f32[256,128], index: 2, kind: input, shape index: {}]
  %s3 = inlined_call_operand.hbm [shape: f32[8,128], index: 3, kind: output, shape index: {}]
  %s4 = sld [smem:[#allocation0]]
  $region26: #{tpu_custom_call.1} parent=0
    _
  %s6 = ssub.s32 1, %s4
  %s7 = scalar_select 0, %s6, %s4
  $region1: #{tpu_custom_call.1} parent=0
    #allocation2 [shape = 'u8[131072]{0}', space=vmem, size = 0x20000, scoped, tag = 'input window, operand 2, single buffered']
    #allocation3 [shape = 's32[1]{0}', space=sflag, size = 0x4, scoped, tag = 'scoped memory for tpu_custom_call.1']
    #allocation4 [shape = 's32[1]{0}', space=sflag, size = 0x4, scoped, tag = 'scoped memory for tpu_custom_call.1']
    #allocation5 [shape = 'u8[4096]{0}', space=vmem, size = 0x1000, scoped, tag = 'output window, operand 0, single buffered']
    %8 = vsyncpa [#allocation3], 0
    %9 = vsyncpa [#allocation4], 0
    // Predicated region
    $region2: #{tpu_custom_call.1} parent=1 // pred_check
      _
    $region3: #{tpu_custom_call.1} parent=1 // pred_check_branch
      %11 = sbr.rel (0) target = $region5
    $region4: #{tpu_custom_call.1} parent=1 // pred_region
      _
    $region5: #{tpu_custom_call.1} parent=1 // pred_fallthru
      _
    // Predicated region
    $region6: #{tpu_custom_call.1} parent=1 // pred_check
      _
    $region7: #{tpu_custom_call.1} parent=1 // pred_check_branch
      %13 = sbr.rel (0) target = $region9
    $region8: #{tpu_custom_call.1} parent=1 // pred_region
      _
    $region9: #{tpu_custom_call.1} parent=1 // pred_fallthru
      _
    // Predicated region
    $region10: #{tpu_custom_call.1} parent=1 // pred_check
      _
    $region11: #{tpu_custom_call.1} parent=1 // pred_check_branch
      %15 = sbr.rel (0) target = $region13
    $region12: #{tpu_custom_call.1} parent=1 // pred_region
      %s17 = ssub.s32 4096, 4096
      %18 = vsyncadd [#allocation3], %s17
      %s19 = sshll.u32 [#allocation2], 4
      %s20 = int_to_ptr.vmem [resolvable:$true] %s19
      %25 = dma.hbm_to_vmem [thread:$0]  %s2, 4096, %s20, [#allocation3], 128, 128, 8
    $region13: #{tpu_custom_call.1} parent=1 // pred_fallthru
      _
    // Predicated region
    $region14: #{tpu_custom_call.1} parent=1 // pred_check
      _
    $region15: #{tpu_custom_call.1} parent=1 // pred_check_branch
      %27 = sbr.rel (0) target = $region17
    $region16: #{tpu_custom_call.1} parent=1 // pred_region
      %28 = dma.done [#allocation3], 4096
    $region17: #{tpu_custom_call.1} parent=1 // pred_fallthru
      _
    %v29 = vld [vmem:[%s0] sm:$0xff]
    %vm30 = vcmp.gt.s32.totalorder %v29, 0
    %v31 = vsel %vm30, %v29, 0
    %vm32 = vcmp.lt.s32.totalorder %v31, 5
    %v33 = vsel %vm32, %v31, 5
    %v34 = vld [vmem:[%s1] sm:$0xff]
    %vm35 = vcmp.gt.s32.totalorder %v34, 0
    %v36 = vsel %vm35, %v34, 0
    %vm37 = vcmp.lt.s32.totalorder %v36, 5
    %v38 = vsel %vm37, %v36, 5
    %v39 = vadd.s32 %v38, 128
    %v40 = vlaneseq
    %v41 = vand.u32 %v40, 127
    %v42 = vadd.s32 %v41, 128
    %43 = vset.pattern.permute.xlu0 0
    %44 = vperm.xlu0 %43, %v33
    %v45 = vpop.permute.xlu0 %44
    %vm46 = vcmp.eq.s32.totalorder %v41, %v45
    %vm47 = vcmp.eq.s32.totalorder %v42, %v45
    %48 = vset.pattern.permute.xlu0 0
    %49 = vperm.xlu0 %48, %v39
    %v50 = vpop.permute.xlu0 %49
    %vm51 = vcmp.eq.s32.totalorder %v41, %v50
    %vm52 = vcmp.eq.s32.totalorder %v42, %v50
    %vm53 = vmor %vm46, %vm51
    %vm54 = vmor %vm47, %vm52
    %v55 = vsel %vm53, 1, 0
    %v56 = vsel %vm54, 1, 0
    %v57 = vcvt.s32.f32 %v55
    %v58 = vcvt.s32.f32 %v56
    %v59 = vld [vmem:[#allocation2] sm:$0xff]
    %v60 = vld [vmem:[#allocation2 + $0x8] sm:$0xff]
    %v61 = vld [vmem:[#allocation2 + $0x10] sm:$0xff]
    %v62 = vld [vmem:[#allocation2 + $0x18] sm:$0xff]
    %v63 = vld [vmem:[#allocation2 + $0x20] sm:$0xff]
    %v64 = vld [vmem:[#allocation2 + $0x28] sm:$0xff]
    %v65 = vld [vmem:[#allocation2 + $0x30] sm:$0xff]
    %v66 = vld [vmem:[#allocation2 + $0x38] sm:$0xff]
    %v67 = vld [vmem:[#allocation2 + $0x40] sm:$0xff]
    %v68 = vld [vmem:[#allocation2 + $0x48] sm:$0xff]
    %v69 = vld [vmem:[#allocation2 + $0x50] sm:$0xff]
    %v70 = vld [vmem:[#allocation2 + $0x58] sm:$0xff]
    %v71 = vld [vmem:[#allocation2 + $0x60] sm:$0xff]
    %v72 = vld [vmem:[#allocation2 + $0x68] sm:$0xff]
    %v73 = vld [vmem:[#allocation2 + $0x70] sm:$0xff]
    %v74 = vld [vmem:[#allocation2 + $0x78] sm:$0xff]
    %v75 = vld [vmem:[#allocation2 + $0x80] sm:$0xff]
    %v76 = vld [vmem:[#allocation2 + $0x88] sm:$0xff]
    %v77 = vld [vmem:[#allocation2 + $0x90] sm:$0xff]
    %v78 = vld [vmem:[#allocation2 + $0x98] sm:$0xff]
    %v79 = vld [vmem:[#allocation2 + $0xa0] sm:$0xff]
    %v80 = vld [vmem:[#allocation2 + $0xa8] sm:$0xff]
    %v81 = vld [vmem:[#allocation2 + $0xb0] sm:$0xff]
    %v82 = vld [vmem:[#allocation2 + $0xb8] sm:$0xff]
    %v83 = vld [vmem:[#allocation2 + $0xc0] sm:$0xff]
    %v84 = vld [vmem:[#allocation2 + $0xc8] sm:$0xff]
    %v85 = vld [vmem:[#allocation2 + $0xd0] sm:$0xff]
    %v86 = vld [vmem:[#allocation2 + $0xd8] sm:$0xff]
    %v87 = vld [vmem:[#allocation2 + $0xe0] sm:$0xff]
    %v88 = vld [vmem:[#allocation2 + $0xe8] sm:$0xff]
    %v89 = vld [vmem:[#allocation2 + $0xf0] sm:$0xff]
    %v90 = vld [vmem:[#allocation2 + $0xf8] sm:$0xff]
    %91 = vmatprep.subr.mxu0 0.0
    %92 = vmatpush1.msra.mxu0 %v59
    %93 = vmatprep.subr.mxu0 0.0
    %94 = vmatpush1.msra.mxu0 %v60
    %95 = vmatprep.subr.mxu0 0.0
    %96 = vmatpush1.msra.mxu0 %v61
    %97 = vmatprep.subr.mxu0 0.0
    %98 = vmatpush1.msra.mxu0 %v62
    %99 = vmatprep.subr.mxu0 0.0
    %100 = vmatpush1.msra.mxu0 %v63
    %101 = vmatprep.subr.mxu0 0.0
    %102 = vmatpush1.msra.mxu0 %v64
    %103 = vmatprep.subr.mxu0 0.0
    %104 = vmatpush1.msra.mxu0 %v65
    %105 = vmatprep.subr.mxu0 0.0
    %106 = vmatpush1.msra.mxu0 %v66
    %107 = vmatprep.subr.mxu0 0.0
    %108 = vmatpush1.msra.mxu0 %v67
    %109 = vmatprep.subr.mxu0 0.0
    %110 = vmatpush1.msra.mxu0 %v68
    %111 = vmatprep.subr.mxu0 0.0
    %112 = vmatpush1.msra.mxu0 %v69
    %113 = vmatprep.subr.mxu0 0.0
    %114 = vmatpush1.msra.mxu0 %v70
    %115 = vmatprep.subr.mxu0 0.0
    %116 = vmatpush1.msra.mxu0 %v71
    %117 = vmatprep.subr.mxu0 0.0
    %118 = vmatpush1.msra.mxu0 %v72
    %119 = vmatprep.subr.mxu0 0.0
    %120 = vmatpush1.msra.mxu0 %v73
    %121 = vmatprep.subr.mxu0 0.0
    %122 = vmatpush1.msra.mxu0 %v74
    %123 = vmatprep.subr.mxu0 0.0
    %124 = vmatpush1.msra.mxu0 %v75
    %125 = vmatprep.subr.mxu0 0.0
    %126 = vmatpush1.msra.mxu0 %v76
    %127 = vmatprep.subr.mxu0 0.0
    %128 = vmatpush1.msra.mxu0 %v77
    %129 = vmatprep.subr.mxu0 0.0
    %130 = vmatpush1.msra.mxu0 %v78
    %131 = vmatprep.subr.mxu0 0.0
    %132 = vmatpush1.msra.mxu0 %v79
    %133 = vmatprep.subr.mxu0 0.0
    %134 = vmatpush1.msra.mxu0 %v80
    %135 = vmatprep.subr.mxu0 0.0
    %136 = vmatpush1.msra.mxu0 %v81
    %137 = vmatprep.subr.mxu0 0.0
    %138 = vmatpush1.msra.mxu0 %v82
    %139 = vmatprep.subr.mxu0 0.0
    %140 = vmatpush1.msra.mxu0 %v83
    %141 = vmatprep.subr.mxu0 0.0
    %142 = vmatpush1.msra.mxu0 %v84
    %143 = vmatprep.subr.mxu0 0.0
    %144 = vmatpush1.msra.mxu0 %v85
    %145 = vmatprep.subr.mxu0 0.0
    %146 = vmatpush1.msra.mxu0 %v86
    %147 = vmatprep.subr.mxu0 0.0
    %148 = vmatpush1.msra.mxu0 %v87
    %149 = vmatprep.subr.mxu0 0.0
    %150 = vmatpush1.msra.mxu0 %v88
    %151 = vmatprep.subr.mxu0 0.0
    %152 = vmatpush1.msra.mxu0 %v89
    %153 = vmatprep.subr.mxu0 0.0
    %154 = vmatpush1.msra.mxu0 %v90
    %155 = vmatprep.mubr.f32.mxu0 %v58
    %156 = vmatmul.mubr.f32.gmra.mrb[0].mxu0 %v57
    %v157 = vpop.f32.mrb[0].mxu0
    %v158 = vadd.f32 0.0, %v157
    %v159 = vpop.f32.mrb[0].mxu0
    %160 = vdwg.mxu0
    %161 = vst [vmem:[#allocation5] sm:$0xff] %v158
    // Predicated region
    $region18: #{tpu_custom_call.1} parent=1 // pred_check
      _
    $region19: #{tpu_custom_call.1} parent=1 // pred_check_branch
      %163 = sbr.rel (0) target = $region21
    $region20: #{tpu_custom_call.1} parent=1 // pred_region
      %s165 = ssub.s32 128, 128
      %166 = vsyncadd [#allocation4], %s165
      %s168 = sshll.u32 [#allocation5], 4
      %s169 = int_to_ptr.vmem [resolvable:$true] %s168
      %171 = dma.vmem_to_hbm [thread:$0]  %s169, 128, %s3, [#allocation4]
    $region21: #{tpu_custom_call.1} parent=1 // pred_fallthru
      _
    // Predicated region
    $region22: #{tpu_custom_call.1} parent=1 // pred_check
      _
    $region23: #{tpu_custom_call.1} parent=1 // pred_check_branch
      %173 = sbr.rel (0) target = $region25
    $region24: #{tpu_custom_call.1} parent=1 // pred_region
      %174 = dma.done [#allocation4], 128
    $region25: #{tpu_custom_call.1} parent=1 // pred_fallthru
      _
    %175 = vsyncpa [#allocation3], 1
    %176 = vsyncpa [#allocation4], 1

</llo_original>
